<compile_context>
chip_gen: v5e
topology: v5e:2x2
jax: 0.10.0
libtpu: 0.0.40
codegen_flags: <defaults>
</compile_context>

<pallas_src>
import functools

import jax
import jax.numpy as jnp
from jax.experimental import pallas as pl
from jax.experimental.pallas import tpu as pltpu


def _round_up(v, m):
    return (v + m - 1) // m * m


def _is_multi_tc_chip():
    # v7x has 2 TensorCores per chip; v5e/v6e have 1.
    try:
        return "v7" in jax.devices()[0].device_kind.lower()
    except Exception:
        return False


def _vmem_capacity_bytes():
    try:
        return int(pltpu.get_tpu_info().vmem_capacity_bytes)
    except Exception:
        return 64 << 20  # v7x per-TC capacity; conservative default.


def _select_tiling(n_rows, d, h, x_bytes, dot_bytes, tm_max=1024):
    """Row tile + explicit scoped-VMEM budget.

    Per-TensorCore buffer model:
      x tile    : 2 (double buffered) * tm * D * x_bytes
      out tile  : 2 (double buffered) * tm * 2D * x_bytes
      weights   : single-buffered, grid-invariant: (D/2*H + H*D) * dot_bytes + biases
      f32 temps : tm * (H + 3D) * 4   (h, compacted shift|scale, fused store slab)
    """
    weight_bytes = ((d // 2) * h + h * d) * dot_bytes + (h + d) * 4
    per_row = 2 * d * x_bytes + 2 * 2 * d * x_bytes + (h + 3 * d) * 4
    vmem_cap = _vmem_capacity_bytes()
    budget = min(48 << 20, int(vmem_cap * 0.75))   # keep headroom even on v7x (64 MiB/TC)
    headroom = 4 << 20
    tm_fit = (budget - weight_bytes - headroom) // max(per_row, 1)
    tm = max(8, min(tm_max, int(tm_fit), _round_up(n_rows, 8)))
    tm = max(8, (tm // 8) * 8)
    # v7x megacore: keep the row grid >= 2 steps so dimension_semantics=("parallel",)
    # can shard rows across both TensorCores.  On single-TC chips keep the largest
    # tile that fits (fewer steps amortize the ~0.35 us/step pipeline overhead).
    if _is_multi_tc_chip() and n_rows >= 16 and pl.cdiv(n_rows, tm) < 2:
        tm = max(8, ((n_rows // 2) // 8) * 8)
    needed = weight_bytes + tm * per_row + headroom
    vmem_limit = int(min(max(needed, 32 << 20), int(vmem_cap * 0.9)))
    return tm, vmem_limit


def _coupling_kernel(x_ref, w1_ref, b1_ref, w2_ref, b2_ref, out_ref, *,
                     d_embed, invert_mask, reverse, dot_dtype):
    x = x_ref[...]                                   # (tm, D)
    half = d_embed // 2

    # Static mask specialization (channel-wise mask):
    #   * mask==1 channels feed the MLP (active inputs) and pass through unchanged,
    #   * mask==0 channels receive shift/scale ("live" outputs).
    # The wrapper compacted W1 to the D/2 active input rows and W2/b2 to the D live
    # output columns, so the kernel does zero mask VPU work and layer-2 is (H, D).
    if invert_mask:
        x_act, x_live = x[:, half:], x[:, :half]
    else:
        x_act, x_live = x[:, :half], x[:, half:]

    # Layer 1: (tm, D/2) @ (D/2, H), f32 MXU accumulation + f32 bias/ReLU epilogue.
    h = jnp.dot(x_act.astype(dot_dtype), w1_ref[...],
                preferred_element_type=jnp.float32)
    h = jnp.maximum(h + b1_ref[...], 0.0)

    # Layer 2 (compacted): (tm, H) @ (H, D) -> [shift_live | scale_live].
    # TODO(synk): for log-det-critical bf16 runs, keep this LHS in f32 (weights-only bf16).
    ss = jnp.dot(h.astype(dot_dtype), w2_ref[...],
                 preferred_element_type=jnp.float32)
    ss = ss + b2_ref[...]
    shift_live = ss[:, :half]
    scale_live = ss[:, half:]

    x_live_f = x_live.astype(jnp.float32)
    if reverse:
        y_live = (x_live_f - shift_live) * jnp.exp(-scale_live)
    else:
        y_live = x_live_f * jnp.exp(scale_live) + shift_live

    # Passthrough half: shift = scale = 0  =>  y = x, scale = 0.
    x_pass = x_act.astype(jnp.float32)
    zeros = jnp.zeros_like(scale_live)

    # Single lane-dense fused output slab [y | scale] of width 2D, one full-block store.
    # TODO(synk): for production D, align `half` to 128 lanes to make these concats free.
    if invert_mask:
        parts = (y_live, x_pass, scale_live, zeros)
    else:
        parts = (x_pass, y_live, zeros, scale_live)
    out_ref[...] = jnp.concatenate(parts, axis=-1).astype(out_ref.dtype)


def affine_coupling_forward(x, w1, b1, w2, b2, *, invert_mask=False,
                            reverse=False, tm_max=1024, dot_dtype=jnp.float32):
    """Channel-wise AffineCouplingLayer forward.

    x: [B, T, D]; w1: [D, H]; b1: [H]; w2: [H, 2D]; b2: [2D].
    Returns (y, scale), each [B, T, D].
    dot_dtype=jnp.bfloat16 uses bf16 MXU operands (f32 accumulation + f32 epilogue);
    beneficial on v5e/v6e/v7x alike (the f32 epilogue avoids v5e's missing bf16 VPU/EUP).
    # TODO(synk): optional fp8 weight pre-quantization for v7x's fp8 MXU path.
    """
    B, T, D = x.shape
    H = w1.shape[1]
    half = D // 2
    N = B * T
    x2d = x.reshape(N, D)                            # free reshape, no copy

    # ---- static weight specialization (tiny, once per call) ----
    if invert_mask:
        w1_act = w1[half:, :]                        # mask keeps second half of channels
        shift_cols = slice(0, half)                  # ~mask live output channels
        scale_cols = slice(D, D + half)
    else:
        w1_act = w1[:half, :]                        # mask keeps first half of channels
        shift_cols = slice(half, D)
        scale_cols = slice(D + half, 2 * D)
    w1_act = w1_act.astype(dot_dtype)
    b1_r = b1.reshape(1, H).astype(jnp.float32)
    # Compacted layer-2 projection: only the D live columns [shift_live | scale_live].
    w2_c = jnp.concatenate([w2[:, shift_cols], w2[:, scale_cols]], axis=1).astype(dot_dtype)
    b2_c = jnp.concatenate([b2[shift_cols], b2[scale_cols]]).reshape(1, D).astype(jnp.float32)

    # ---- tiling: no row padding, ragged last block handled by Pallas ----
    x_bytes = jnp.dtype(x.dtype).itemsize
    dot_bytes = jnp.dtype(dot_dtype).itemsize
    tm, vmem_limit = _select_tiling(N, D, H, x_bytes, dot_bytes, tm_max)
    grid = (pl.cdiv(N, tm),)

    cost = pl.CostEstimate(
        flops=2 * N * (half * H + H * D),
        transcendentals=N * half,
        bytes_accessed=(N * D + N * 2 * D) * x_bytes
                       + (w1_act.size + w2_c.size) * dot_bytes
                       + (b1_r.size + b2_c.size) * 4,
    )

    kernel = functools.partial(_coupling_kernel, d_embed=D,
                               invert_mask=invert_mask, reverse=reverse,
                               dot_dtype=dot_dtype)

    full = lambda i: (0, 0)

    def _call(weight_pipeline_mode):
        wkw = {} if weight_pipeline_mode is None else {"pipeline_mode": weight_pipeline_mode}
        return pl.pallas_call(
            kernel,
            out_shape=jax.ShapeDtypeStruct((N, 2 * D), x.dtype),
            grid_spec=pltpu.PrefetchScalarGridSpec(
                num_scalar_prefetch=0,
                grid=grid,
                in_specs=[
                    pl.BlockSpec((tm, D), lambda i: (i, 0)),   # x rows
                    pl.BlockSpec((half, H), full, **wkw),      # W1 (active input rows only)
                    pl.BlockSpec((1, H), full, **wkw),         # b1
                    pl.BlockSpec((H, D), full, **wkw),         # W2 (compacted live columns)
                    pl.BlockSpec((1, D), full, **wkw),         # b2 (compacted live columns)
                ],
                out_specs=pl.BlockSpec((tm, 2 * D), lambda i: (i, 0)),  # [y | scale] slab
            ),
            compiler_params=pltpu.CompilerParams(
                dimension_semantics=("parallel",),
                vmem_limit_bytes=vmem_limit),
            cost_estimate=cost,
        )(x2d, w1_act, b1_r, w2_c, b2_c)

    try:
        # Grid-invariant weights/biases: single-buffer them to halve their VMEM footprint.
        out = _call(pl.Buffered(1))
    except Exception:
        out = _call(None)

    y = out[:, :D].reshape(B, T, D)
    scale = out[:, D:].reshape(B, T, D)
    return y, scale


def _reference_forward(x, w1, b1, w2, b2, invert_mask=False, reverse=False):
    D = x.shape[-1]
    idx = jnp.arange(D)
    mask = (idx >= D // 2) if invert_mask else (idx < D // 2)
    mask = mask.astype(x.dtype)
    inv = 1.0 - mask
    x_mask = x * mask
    h = jnp.maximum(x_mask @ w1 + b1, 0.0)
    out = h @ w2 + b2
    shift, scale = out[..., :D], out[..., D:]
    shift = shift * inv
    scale = scale * inv
    if reverse:
        y = (x - shift) * jnp.exp(-scale)
    else:
        y = x * jnp.exp(scale) + shift
    return y, scale


if __name__ == "__main__":
    # Module-consistent small config: d_embed=32, d_hidden=64, num_mlp_layers=2
    # (Linear->ReLU->Linear), mask_type=CHANNEL_WISE.
    B, T, D, H = 2, 8, 32, 64

    key = jax.random.PRNGKey(0)
    kx, k1, k2, k3, k4 = jax.random.split(key, 5)
    x = jax.random.normal(kx, (B, T, D), dtype=jnp.float32)
    w1 = jax.random.normal(k1, (D, H), dtype=jnp.float32) * 0.1
    b1 = jax.random.normal(k2, (H,), dtype=jnp.float32) * 0.1
    w2 = jax.random.normal(k3, (H, 2 * D), dtype=jnp.float32) * 0.1
    b2 = jax.random.normal(k4, (2 * D,), dtype=jnp.float32) * 0.1

    # Default: channel-wise mask, forward direction.
    y, scale = affine_coupling_forward(x, w1, b1, w2, b2, invert_mask=False)
    jax.block_until_ready((y, scale))
    y_ref, scale_ref = _reference_forward(x, w1, b1, w2, b2, invert_mask=False)
    assert jnp.allclose(y, y_ref, atol=1e-4, rtol=1e-4)
    assert jnp.allclose(scale, scale_ref, atol=1e-4, rtol=1e-4)

    # Inverted mask + reverse direction.
    yi, si = affine_coupling_forward(x, w1, b1, w2, b2, invert_mask=True, reverse=True)
    yi_ref, si_ref = _reference_forward(x, w1, b1, w2, b2, invert_mask=True, reverse=True)
    assert jnp.allclose(yi, yi_ref, atol=1e-4, rtol=1e-4)
    assert jnp.allclose(si, si_ref, atol=1e-4, rtol=1e-4)

    # Ragged row count (exercises the padding-free cdiv grid / masked last block).
    xr = jax.random.normal(kx, (2, 9, D), dtype=jnp.float32)
    yr, sr = affine_coupling_forward(xr, w1, b1, w2, b2)
    yr_ref, sr_ref = _reference_forward(xr, w1, b1, w2, b2)
    assert jnp.allclose(yr, yr_ref, atol=1e-4, rtol=1e-4)
    assert jnp.allclose(sr, sr_ref, atol=1e-4, rtol=1e-4)

    # bf16 MXU-operand path: f32 accumulation + f32 epilogue, looser tolerance.
    yb, sb = affine_coupling_forward(x, w1, b1, w2, b2, dot_dtype=jnp.bfloat16)
    assert jnp.allclose(yb, y_ref, atol=3e-2, rtol=3e-2)
    assert jnp.allclose(sb, scale_ref, atol=3e-2, rtol=3e-2)

    # TODO(synk): MaskType.CHECKERBOARD mask variant not implemented (module default
    # is CHANNEL_WISE, which is what this kernel covers).
    print("KERNEL_OK")
</pallas_src>

<mosaic_0001>
module attributes {stable_mosaic.version = 11 : i64} {
  func.func @_coupling_kernel(%arg0: i32, %arg1: memref<16x32xf32, #tpu.memory_space<vmem>>, %arg2: memref<16x64xf32, #tpu.memory_space<vmem>>, %arg3: memref<1x64xf32, #tpu.memory_space<vmem>>, %arg4: memref<64x32xf32, #tpu.memory_space<vmem>>, %arg5: memref<1x32xf32, #tpu.memory_space<vmem>>, %arg6: memref<16x64xf32, #tpu.memory_space<vmem>>) attributes {dimension_semantics = [#tpu.dimension_semantics<parallel>], iteration_bounds = array<i64: 1>, scalar_prefetch = 0 : i64, scratch_operands = 0 : i64, tpu.core_type = #tpu.core_type<tc>, window_params = [{transform_indices = @transform_0, window_bounds = array<i64: 16, 32>}, {pipeline_mode = #tpu.pipeline_mode<synchronous>, transform_indices = @transform_1, window_bounds = array<i64: 16, 64>}, {pipeline_mode = #tpu.pipeline_mode<synchronous>, transform_indices = @transform_2, window_bounds = array<i64: 1, 64>}, {pipeline_mode = #tpu.pipeline_mode<synchronous>, transform_indices = @transform_3, window_bounds = array<i64: 64, 32>}, {pipeline_mode = #tpu.pipeline_mode<synchronous>, transform_indices = @transform_4, window_bounds = array<i64: 1, 32>}, {transform_indices = @transform_5, window_bounds = array<i64: 16, 64>}]} {
    %c0 = arith.constant 0 : index
    %c0_0 = arith.constant 0 : index
    %0 = vector.load %arg1[%c0, %c0_0] : memref<16x32xf32, #tpu.memory_space<vmem>>, vector<16x32xf32>
    %1 = vector.extract_strided_slice %0 {offsets = [0, 0], sizes = [16, 16], strides = [1, 1]} : vector<16x32xf32> to vector<16x16xf32>
    %2 = vector.extract_strided_slice %0 {offsets = [0, 16], sizes = [16, 16], strides = [1, 1]} : vector<16x32xf32> to vector<16x16xf32>
    %c0_1 = arith.constant 0 : index
    %c0_2 = arith.constant 0 : index
    %3 = vector.load %arg2[%c0_1, %c0_2] : memref<16x64xf32, #tpu.memory_space<vmem>>, vector<16x64xf32>
    %cst = arith.constant dense<0.000000e+00> : vector<16x64xf32>
    %4 = tpu.matmul %1, %3, %cst {dimension_numbers = #tpu.dot_dimension_numbers<[1], [0], [0], [1], [0, 0, 1, 1], [], []>} : vector<16x16xf32>, vector<16x64xf32>, vector<16x64xf32> -> vector<16x64xf32>
    %c0_3 = arith.constant 0 : index
    %c0_4 = arith.constant 0 : index
    %5 = vector.load %arg3[%c0_3, %c0_4] : memref<1x64xf32, #tpu.memory_space<vmem>>, vector<1x64xf32>
    %6 = vector.broadcast %5 : vector<1x64xf32> to vector<16x64xf32>
    %7 = arith.addf %4, %6 : vector<16x64xf32>
    %cst_5 = arith.constant 0.000000e+00 : f32
    %8 = vector.broadcast %cst_5 : f32 to vector<16x64xf32>
    %9 = arith.maximumf %7, %8 : vector<16x64xf32>
    %c0_6 = arith.constant 0 : index
    %c0_7 = arith.constant 0 : index
    %10 = vector.load %arg4[%c0_6, %c0_7] : memref<64x32xf32, #tpu.memory_space<vmem>>, vector<64x32xf32>
    %cst_8 = arith.constant dense<0.000000e+00> : vector<16x32xf32>
    %11 = tpu.matmul %9, %10, %cst_8 {dimension_numbers = #tpu.dot_dimension_numbers<[1], [0], [0], [1], [0, 0, 1, 1], [], []>} : vector<16x64xf32>, vector<64x32xf32>, vector<16x32xf32> -> vector<16x32xf32>
    %c0_9 = arith.constant 0 : index
    %c0_10 = arith.constant 0 : index
    %12 = vector.load %arg5[%c0_9, %c0_10] : memref<1x32xf32, #tpu.memory_space<vmem>>, vector<1x32xf32>
    %13 = vector.broadcast %12 : vector<1x32xf32> to vector<16x32xf32>
    %14 = arith.addf %11, %13 : vector<16x32xf32>
    %15 = vector.extract_strided_slice %14 {offsets = [0, 0], sizes = [16, 16], strides = [1, 1]} : vector<16x32xf32> to vector<16x16xf32>
    %16 = vector.extract_strided_slice %14 {offsets = [0, 16], sizes = [16, 16], strides = [1, 1]} : vector<16x32xf32> to vector<16x16xf32>
    %17 = math.exp %16 : vector<16x16xf32>
    %18 = arith.mulf %2, %17 : vector<16x16xf32>
    %19 = arith.addf %18, %15 : vector<16x16xf32>
    %cst_11 = arith.constant 0.000000e+00 : f32
    %20 = vector.broadcast %cst_11 : f32 to vector<16x16xf32>
    %21 = tpu.concatenate %1, %19, %20, %16 in 1 : vector<16x16xf32>, vector<16x16xf32>, vector<16x16xf32>, vector<16x16xf32> -> vector<16x64xf32>
    %c0_12 = arith.constant 0 : index
    %c0_13 = arith.constant 0 : index
    %22 = vector.load %arg6[%c0_12, %c0_13] : memref<16x64xf32, #tpu.memory_space<vmem>>, vector<16x64xf32>
    tpu.vector_store %arg6[%c0_12, %c0_13], %21 {strides = array<i32>} : memref<16x64xf32, #tpu.memory_space<vmem>>, vector<16x64xf32>,
    return
  }
  func.func @transform_0(%arg0: i32) -> (i32, i32) {
    %c0_i32 = arith.constant 0 : i32
    %c0_i32_0 = arith.constant 0 : i32
    return %arg0, %c0_i32 : i32, i32
  }
  func.func @transform_1(%arg0: i32) -> (i32, i32) {
    %c0_i32 = arith.constant 0 : i32
    %c0_i32_0 = arith.constant 0 : i32
    %c0_i32_1 = arith.constant 0 : i32
    return %c0_i32, %c0_i32_0 : i32, i32
  }
  func.func @transform_2(%arg0: i32) -> (i32, i32) {
    %c0_i32 = arith.constant 0 : i32
    %c0_i32_0 = arith.constant 0 : i32
    %c0_i32_1 = arith.constant 0 : i32
    return %c0_i32, %c0_i32_0 : i32, i32
  }
  func.func @transform_3(%arg0: i32) -> (i32, i32) {
    %c0_i32 = arith.constant 0 : i32
    %c0_i32_0 = arith.constant 0 : i32
    %c0_i32_1 = arith.constant 0 : i32
    return %c0_i32, %c0_i32_0 : i32, i32
  }
  func.func @transform_4(%arg0: i32) -> (i32, i32) {
    %c0_i32 = arith.constant 0 : i32
    %c0_i32_0 = arith.constant 0 : i32
    %c0_i32_1 = arith.constant 0 : i32
    return %c0_i32, %c0_i32_0 : i32, i32
  }
  func.func @transform_5(%arg0: i32) -> (i32, i32) {
    %c0_i32 = arith.constant 0 : i32
    %c0_i32_0 = arith.constant 0 : i32
    return %arg0, %c0_i32 : i32, i32
  }
}

module attributes {stable_mosaic.version = 11 : i64} {
  func.func @_coupling_kernel(%arg0: i32, %arg1: memref<16x32xf32, #tpu.memory_space<vmem>>, %arg2: memref<16x64xf32, #tpu.memory_space<vmem>>, %arg3: memref<1x64xf32, #tpu.memory_space<vmem>>, %arg4: memref<64x32xf32, #tpu.memory_space<vmem>>, %arg5: memref<1x32xf32, #tpu.memory_space<vmem>>, %arg6: memref<16x64xf32, #tpu.memory_space<vmem>>) attributes {dimension_semantics = [#tpu.dimension_semantics<parallel>], iteration_bounds = array<i64: 1>, scalar_prefetch = 0 : i64, scratch_operands = 0 : i64, tpu.core_type = #tpu.core_type<tc>, window_params = [{transform_indices = @transform_0, window_bounds = array<i64: 16, 32>}, {pipeline_mode = #tpu.pipeline_mode<synchronous>, transform_indices = @transform_1, window_bounds = array<i64: 16, 64>}, {pipeline_mode = #tpu.pipeline_mode<synchronous>, transform_indices = @transform_2, window_bounds = array<i64: 1, 64>}, {pipeline_mode = #tpu.pipeline_mode<synchronous>, transform_indices = @transform_3, window_bounds = array<i64: 64, 32>}, {pipeline_mode = #tpu.pipeline_mode<synchronous>, transform_indices = @transform_4, window_bounds = array<i64: 1, 32>}, {transform_indices = @transform_5, window_bounds = array<i64: 16, 64>}]} {
    %c0 = arith.constant 0 : index
    %c0_0 = arith.constant 0 : index
    %0 = vector.load %arg1[%c0, %c0_0] : memref<16x32xf32, #tpu.memory_space<vmem>>, vector<16x32xf32>
    %1 = vector.extract_strided_slice %0 {offsets = [0, 0], sizes = [16, 16], strides = [1, 1]} : vector<16x32xf32> to vector<16x16xf32>
    %2 = vector.extract_strided_slice %0 {offsets = [0, 16], sizes = [16, 16], strides = [1, 1]} : vector<16x32xf32> to vector<16x16xf32>
    %c0_1 = arith.constant 0 : index
    %c0_2 = arith.constant 0 : index
    %3 = vector.load %arg2[%c0_1, %c0_2] : memref<16x64xf32, #tpu.memory_space<vmem>>, vector<16x64xf32>
    %cst = arith.constant dense<0.000000e+00> : vector<16x64xf32>
    %4 = tpu.matmul %1, %3, %cst {dimension_numbers = #tpu.dot_dimension_numbers<[1], [0], [0], [1], [0, 0, 1, 1], [], []>} : vector<16x16xf32>, vector<16x64xf32>, vector<16x64xf32> -> vector<16x64xf32>
    %c0_3 = arith.constant 0 : index
    %c0_4 = arith.constant 0 : index
    %5 = vector.load %arg3[%c0_3, %c0_4] : memref<1x64xf32, #tpu.memory_space<vmem>>, vector<1x64xf32>
    %6 = vector.broadcast %5 : vector<1x64xf32> to vector<16x64xf32>
    %7 = arith.addf %4, %6 : vector<16x64xf32>
    %cst_5 = arith.constant 0.000000e+00 : f32
    %8 = vector.broadcast %cst_5 : f32 to vector<16x64xf32>
    %9 = arith.maximumf %7, %8 : vector<16x64xf32>
    %c0_6 = arith.constant 0 : index
    %c0_7 = arith.constant 0 : index
    %10 = vector.load %arg4[%c0_6, %c0_7] : memref<64x32xf32, #tpu.memory_space<vmem>>, vector<64x32xf32>
    %cst_8 = arith.constant dense<0.000000e+00> : vector<16x32xf32>
    %11 = tpu.matmul %9, %10, %cst_8 {dimension_numbers = #tpu.dot_dimension_numbers<[1], [0], [0], [1], [0, 0, 1, 1], [], []>} : vector<16x64xf32>, vector<64x32xf32>, vector<16x32xf32> -> vector<16x32xf32>
    %c0_9 = arith.constant 0 : index
    %c0_10 = arith.constant 0 : index
    %12 = vector.load %arg5[%c0_9, %c0_10] : memref<1x32xf32, #tpu.memory_space<vmem>>, vector<1x32xf32>
    %13 = vector.broadcast %12 : vector<1x32xf32> to vector<16x32xf32>
    %14 = arith.addf %11, %13 : vector<16x32xf32>
    %15 = vector.extract_strided_slice %14 {offsets = [0, 0], sizes = [16, 16], strides = [1, 1]} : vector<16x32xf32> to vector<16x16xf32>
    %16 = vector.extract_strided_slice %14 {offsets = [0, 16], sizes = [16, 16], strides = [1, 1]} : vector<16x32xf32> to vector<16x16xf32>
    %17 = math.exp %16 : vector<16x16xf32>
    %18 = arith.mulf %2, %17 : vector<16x16xf32>
    %19 = arith.addf %18, %15 : vector<16x16xf32>
    %cst_11 = arith.constant 0.000000e+00 : f32
    %20 = vector.broadcast %cst_11 : f32 to vector<16x16xf32>
    %21 = tpu.concatenate %1, %19, %20, %16 in 1 : vector<16x16xf32>, vector<16x16xf32>, vector<16x16xf32>, vector<16x16xf32> -> vector<16x64xf32>
    %c0_12 = arith.constant 0 : index
    %c0_13 = arith.constant 0 : index
    %22 = vector.load %arg6[%c0_12, %c0_13] : memref<16x64xf32, #tpu.memory_space<vmem>>, vector<16x64xf32>
    tpu.vector_store %arg6[%c0_12, %c0_13], %21 {strides = array<i32>} : memref<16x64xf32, #tpu.memory_space<vmem>>, vector<16x64xf32>,
    return
  }
  func.func @transform_0(%arg0: i32) -> (i32, i32) {
    %c0_i32 = arith.constant 0 : i32
    %c0_i32_0 = arith.constant 0 : i32
    return %arg0, %c0_i32 : i32, i32
  }
  func.func @transform_1(%arg0: i32) -> (i32, i32) {
    %c0_i32 = arith.constant 0 : i32
    %c0_i32_0 = arith.constant 0 : i32
    %c0_i32_1 = arith.constant 0 : i32
    return %c0_i32, %c0_i32_0 : i32, i32
  }
  func.func @transform_2(%arg0: i32) -> (i32, i32) {
    %c0_i32 = arith.constant 0 : i32
    %c0_i32_0 = arith.constant 0 : i32
    %c0_i32_1 = arith.constant 0 : i32
    return %c0_i32, %c0_i32_0 : i32, i32
  }
  func.func @transform_3(%arg0: i32) -> (i32, i32) {
    %c0_i32 = arith.constant 0 : i32
    %c0_i32_0 = arith.constant 0 : i32
    %c0_i32_1 = arith.constant 0 : i32
    return %c0_i32, %c0_i32_0 : i32, i32
  }
  func.func @transform_4(%arg0: i32) -> (i32, i32) {
    %c0_i32 = arith.constant 0 : i32
    %c0_i32_0 = arith.constant 0 : i32
    %c0_i32_1 = arith.constant 0 : i32
    return %c0_i32, %c0_i32_0 : i32, i32
  }
  func.func @transform_5(%arg0: i32) -> (i32, i32) {
    %c0_i32 = arith.constant 0 : i32
    %c0_i32_0 = arith.constant 0 : i32
    return %arg0, %c0_i32 : i32, i32
  }
}

</mosaic_0001>

<llo_original>
// kernel: tpu_custom_call.1
$region0: #{tpu_custom_call.1}
  #allocation0 [shape = 'u32[]', space=smem, size = 0x4, offset = 0x4, fixed_abs, tag = 'smem constant byte address 0x4 - core index']
  #allocation1 [shape = 'u32[72,128]{1,0:T(1,128)}', space=vmem, size = 0x9000, scoped, tag = 'internal scratch']
  %s0 = inlined_call_operand.vmem [shape: f32[16,32], index: 0, kind: input, shape index: {}]
  %s1 = inlined_call_operand.vmem [shape: f32[16,64], index: 1, kind: input, shape index: {}]
  %s2 = inlined_call_operand.vmem [shape: f32[1,64], index: 2, kind: input, shape index: {}]
  %s3 = inlined_call_operand.vmem [shape: f32[64,32], index: 3, kind: input, shape index: {}]
  %s4 = inlined_call_operand.vmem [shape: f32[1,32], index: 4, kind: input, shape index: {}]
  %s5 = inlined_call_operand.hbm [shape: f32[16,64], index: 5, kind: output, shape index: {}]
  %s6 = sld [smem:[#allocation0]]
  $region30: #{tpu_custom_call.1} parent=0
    _
  %s8 = ssub.s32 1, %s6
  %s9 = scalar_select 0, %s8, %s6
  $region1: #{tpu_custom_call.1} parent=0
    #allocation2 [shape = 'u8[8192]{0}', space=vmem, size = 0x2000, scoped, tag = 'output window, operand 0, single buffered']
    #allocation3 [shape = 's32[1]{0}', space=sflag, size = 0x4, scoped, tag = 'scoped memory for tpu_custom_call.1']
    %10 = vsyncpa [#allocation3], 0
    // Predicated region
    $region2: #{tpu_custom_call.1} parent=1 // pred_check
      _
    $region3: #{tpu_custom_call.1} parent=1 // pred_check_branch
      %12 = sbr.rel (0) target = $region5
    $region4: #{tpu_custom_call.1} parent=1 // pred_region
      _
    $region5: #{tpu_custom_call.1} parent=1 // pred_fallthru
      _
    // Predicated region
    $region6: #{tpu_custom_call.1} parent=1 // pred_check
      _
    $region7: #{tpu_custom_call.1} parent=1 // pred_check_branch
      %14 = sbr.rel (0) target = $region9
    $region8: #{tpu_custom_call.1} parent=1 // pred_region
      _
    $region9: #{tpu_custom_call.1} parent=1 // pred_fallthru
      _
    // Predicated region
    $region10: #{tpu_custom_call.1} parent=1 // pred_check
      _
    $region11: #{tpu_custom_call.1} parent=1 // pred_check_branch
      %16 = sbr.rel (0) target = $region13
    $region12: #{tpu_custom_call.1} parent=1 // pred_region
      _
    $region13: #{tpu_custom_call.1} parent=1 // pred_fallthru
      _
    // Predicated region
    $region14: #{tpu_custom_call.1} parent=1 // pred_check
      _
    $region15: #{tpu_custom_call.1} parent=1 // pred_check_branch
      %18 = sbr.rel (0) target = $region17
    $region16: #{tpu_custom_call.1} parent=1 // pred_region
      _
    $region17: #{tpu_custom_call.1} parent=1 // pred_fallthru
      _
    // Predicated region
    $region18: #{tpu_custom_call.1} parent=1 // pred_check
      _
    $region19: #{tpu_custom_call.1} parent=1 // pred_check_branch
      %20 = sbr.rel (0) target = $region21
    $region20: #{tpu_custom_call.1} parent=1 // pred_region
      _
    $region21: #{tpu_custom_call.1} parent=1 // pred_fallthru
      _
    %v21 = vld [vmem:[%s0] sm:$0xff]
    %v22 = vld [vmem:[%s0 + $0x8] sm:$0xff]
    %v23 = vld [vmem:[%s1] sm:$0xff]
    %v24 = vld [vmem:[%s1 + $0x8] sm:$0xff]
    %v25 = vld [vmem:[%s2] sm:$0x1]
    %v27 = vperm.slane %v25, 0
    %vm29 = vcmask 130048
    %v31 = vsel %vm29, %v21, 0
    %v34 = vsel %vm29, %v22, 0
    %36 = vmatpush.msra.mxu0 0.0
    %37 = vmatpush.msra.mxu0 0.0
    %38 = vmatpush.msra.mxu0 0.0
    %39 = vmatpush.msra.mxu0 0.0
    %40 = vmatpush.msra.mxu0 0.0
    %41 = vmatpush.msra.mxu0 0.0
    %42 = vmatpush.msra.mxu0 0.0
    %43 = vmatpush.msra.mxu0 0.0
    %44 = vmatpush.msra.mxu0 0.0
    %45 = vmatpush.msra.mxu0 0.0
    %46 = vmatpush.msra.mxu0 0.0
    %47 = vmatpush.msra.mxu0 0.0
    %48 = vmatpush.msra.mxu0 0.0
    %49 = vmatpush.msra.mxu0 0.0
    %50 = vmatpush.msra.mxu0 %v24
    %51 = vmatpush.msra.mxu0 %v23
    %52 = vmatmul.f32.gmra.mxu0 %v31
    %v53 = vpop.f32.mrf.mxu0
    %v54 = vadd.f32 %v27, %v53
    %55 = vmatmul.f32.gmra.mxu0 %v34
    %v56 = vpop.f32.mrf.mxu0
    %v57 = vadd.f32 %v27, %v56
    %58 = vdwg.mxu0
    %v59 = vmax.f32 %v54, 0.0
    %v60 = vmax.f32 %v57, 0.0
    %v61 = vld [vmem:[%s3] sm:$0xff]
    %v62 = vld [vmem:[%s3 + $0x8] sm:$0xff]
    %v63 = vld [vmem:[%s3 + $0x10] sm:$0xff]
    %v64 = vld [vmem:[%s3 + $0x18] sm:$0xff]
    %v65 = vld [vmem:[%s3 + $0x20] sm:$0xff]
    %v66 = vld [vmem:[%s3 + $0x28] sm:$0xff]
    %v67 = vld [vmem:[%s3 + $0x30] sm:$0xff]
    %v68 = vld [vmem:[%s3 + $0x38] sm:$0xff]
    %v69 = vld [vmem:[%s4] sm:$0x1]
    %v71 = vperm.slane %v69, 0
    %vm73 = vcmask 523264
    %v75 = vsel %vm73, %v59, 0
    %v78 = vsel %vm73, %v60, 0
    %80 = vmatpush.msra.mxu0 0.0
    %81 = vmatpush.msra.mxu0 0.0
    %82 = vmatpush.msra.mxu0 0.0
    %83 = vmatpush.msra.mxu0 0.0
    %84 = vmatpush.msra.mxu0 0.0
    %85 = vmatpush.msra.mxu0 0.0
    %86 = vmatpush.msra.mxu0 0.0
    %87 = vmatpush.msra.mxu0 0.0
    %88 = vmatpush.msra.mxu0 %v68
    %89 = vmatpush.msra.mxu0 %v67
    %90 = vmatpush.msra.mxu0 %v66
    %91 = vmatpush.msra.mxu0 %v65
    %92 = vmatpush.msra.mxu0 %v64
    %93 = vmatpush.msra.mxu0 %v63
    %94 = vmatpush.msra.mxu0 %v62
    %95 = vmatpush.msra.mxu0 %v61
    %96 = vmatmul.f32.gmra.mxu0 %v75
    %v97 = vpop.f32.mrf.mxu0
    %v98 = vadd.f32 %v71, %v97
    %99 = vmatmul.f32.gmra.mxu0 %v78
    %v100 = vpop.f32.mrf.mxu0
    %v101 = vadd.f32 %v71, %v100
    %102 = vdwg.mxu0
    %v103 = vmul.f32 %v98, 1.442695
    %v104 = vpow.pop %v103
    %v105 = vmul.f32 %v101, 1.442695
    %v106 = vpow.pop %v105
    %v107 = vmul.f32 %v21, %v104
    %v108 = vmul.f32 %v22, %v106
    %111 = vrot.lane.b32.xlu0 %v98, 16
    %v112 = vpop.permute.xlu0 %111
    %113 = vrot.lane.b32.xlu0 %v101, 16
    %v114 = vpop.permute.xlu0 %113
    %v117 = vadd.f32 %v107, %v112
    %v118 = vadd.f32 %v108, %v114
    %119 = vrot.lane.b32.xlu0 %v98, 32
    %v120 = vpop.permute.xlu0 %119
    %121 = vrot.lane.b32.xlu0 %v101, 32
    %v122 = vpop.permute.xlu0 %121
    %v125 = vsel %vm29, %v21, %v117
    %v126 = vsel %vm29, %v22, %v118
    %vm127 = vcmask 261120
    %v128 = vsel %vm127, %v125, 0.0
    %v129 = vsel %vm127, %v126, 0.0
    %vm130 = vcmask 392192
    %v131 = vsel %vm130, %v128, %v120
    %v132 = vsel %vm130, %v129, %v122
    %133 = vst.msk [vmem:[#allocation2] sm:$0xff] %vm73, %v131
    %134 = vst.msk [vmem:[#allocation2 + $0x8] sm:$0xff] %vm73, %v132
    // Predicated region
    $region22: #{tpu_custom_call.1} parent=1 // pred_check
      _
    $region23: #{tpu_custom_call.1} parent=1 // pred_check_branch
      %136 = sbr.rel (0) target = $region25
    $region24: #{tpu_custom_call.1} parent=1 // pred_region
      %138 = vsyncadd [#allocation3], 0
      %s139 = sshll.u32 [#allocation2], 4
      %s140 = int_to_ptr.vmem [resolvable:$true] %s139
      %s141 = sshll.u32 %s5, 4
      %s142 = int_to_ptr.hbm [resolvable:$true] %s141
      %147 = dma.vmem_to_hbm [thread:$0]  %s140, 256, %s142, [#allocation3], 128, 128, 8
    $region25: #{tpu_custom_call.1} parent=1 // pred_fallthru
      _
    // Predicated region
    $region26: #{tpu_custom_call.1} parent=1 // pred_check
      _
    $region27: #{tpu_custom_call.1} parent=1 // pred_check_branch
      %149 = sbr.rel (0) target = $region29
    $region28: #{tpu_custom_call.1} parent=1 // pred_region
      %151 = dma.done [#allocation3], 256
    $region29: #{tpu_custom_call.1} parent=1 // pred_fallthru
      _
    %152 = vsyncpa [#allocation3], 1

// kernel: tpu_custom_call.1
$region0: #{tpu_custom_call.1}
  #allocation0 [shape = 'u32[]', space=smem, size = 0x4, offset = 0x4, fixed_abs, tag = 'smem constant byte address 0x4 - core index']
  #allocation1 [shape = 'u32[72,128]{1,0:T(1,128)}', space=vmem, size = 0x9000, scoped, tag = 'internal scratch']
  %s0 = inlined_call_operand.vmem [shape: f32[16,32], index: 0, kind: input, shape index: {}]
  %s1 = inlined_call_operand.vmem [shape: f32[16,64], index: 1, kind: input, shape index: {}]
  %s2 = inlined_call_operand.vmem [shape: f32[1,64], index: 2, kind: input, shape index: {}]
  %s3 = inlined_call_operand.vmem [shape: f32[64,32], index: 3, kind: input, shape index: {}]
  %s4 = inlined_call_operand.vmem [shape: f32[1,32], index: 4, kind: input, shape index: {}]
  %s5 = inlined_call_operand.hbm [shape: f32[16,64], index: 5, kind: output, shape index: {}]
  %s6 = sld [smem:[#allocation0]]
  $region30: #{tpu_custom_call.1} parent=0
    _
  %s8 = ssub.s32 1, %s6
  %s9 = scalar_select 0, %s8, %s6
  $region1: #{tpu_custom_call.1} parent=0
    #allocation2 [shape = 'u8[8192]{0}', space=vmem, size = 0x2000, scoped, tag = 'output window, operand 0, single buffered']
    #allocation3 [shape = 's32[1]{0}', space=sflag, size = 0x4, scoped, tag = 'scoped memory for tpu_custom_call.1']
    %10 = vsyncpa [#allocation3], 0
    // Predicated region
    $region2: #{tpu_custom_call.1} parent=1 // pred_check
      _
    $region3: #{tpu_custom_call.1} parent=1 // pred_check_branch
      %12 = sbr.rel (0) target = $region5
    $region4: #{tpu_custom_call.1} parent=1 // pred_region
      _
    $region5: #{tpu_custom_call.1} parent=1 // pred_fallthru
      _
    // Predicated region
    $region6: #{tpu_custom_call.1} parent=1 // pred_check
      _
    $region7: #{tpu_custom_call.1} parent=1 // pred_check_branch
      %14 = sbr.rel (0) target = $region9
    $region8: #{tpu_custom_call.1} parent=1 // pred_region
      _
    $region9: #{tpu_custom_call.1} parent=1 // pred_fallthru
      _
    // Predicated region
    $region10: #{tpu_custom_call.1} parent=1 // pred_check
      _
    $region11: #{tpu_custom_call.1} parent=1 // pred_check_branch
      %16 = sbr.rel (0) target = $region13
    $region12: #{tpu_custom_call.1} parent=1 // pred_region
      _
    $region13: #{tpu_custom_call.1} parent=1 // pred_fallthru
      _
    // Predicated region
    $region14: #{tpu_custom_call.1} parent=1 // pred_check
      _
    $region15: #{tpu_custom_call.1} parent=1 // pred_check_branch
      %18 = sbr.rel (0) target = $region17
    $region16: #{tpu_custom_call.1} parent=1 // pred_region
      _
    $region17: #{tpu_custom_call.1} parent=1 // pred_fallthru
      _
    // Predicated region
    $region18: #{tpu_custom_call.1} parent=1 // pred_check
      _
    $region19: #{tpu_custom_call.1} parent=1 // pred_check_branch
      %20 = sbr.rel (0) target = $region21
    $region20: #{tpu_custom_call.1} parent=1 // pred_region
      _
    $region21: #{tpu_custom_call.1} parent=1 // pred_fallthru
      _
    %v21 = vld [vmem:[%s0] sm:$0xff]
    %v22 = vld [vmem:[%s0 + $0x8] sm:$0xff]
    %v23 = vld [vmem:[%s1] sm:$0xff]
    %v24 = vld [vmem:[%s1 + $0x8] sm:$0xff]
    %v25 = vld [vmem:[%s2] sm:$0x1]
    %v27 = vperm.slane %v25, 0
    %vm29 = vcmask 130048
    %v31 = vsel %vm29, %v21, 0
    %v34 = vsel %vm29, %v22, 0
    %36 = vmatpush.msra.mxu0 0.0
    %37 = vmatpush.msra.mxu0 0.0
    %38 = vmatpush.msra.mxu0 0.0
    %39 = vmatpush.msra.mxu0 0.0
    %40 = vmatpush.msra.mxu0 0.0
    %41 = vmatpush.msra.mxu0 0.0
    %42 = vmatpush.msra.mxu0 0.0
    %43 = vmatpush.msra.mxu0 0.0
    %44 = vmatpush.msra.mxu0 0.0
    %45 = vmatpush.msra.mxu0 0.0
    %46 = vmatpush.msra.mxu0 0.0
    %47 = vmatpush.msra.mxu0 0.0
    %48 = vmatpush.msra.mxu0 0.0
    %49 = vmatpush.msra.mxu0 0.0
    %50 = vmatpush.msra.mxu0 %v24
    %51 = vmatpush.msra.mxu0 %v23
    %52 = vmatmul.f32.gmra.mxu0 %v31
    %v53 = vpop.f32.mrf.mxu0
    %v54 = vadd.f32 %v27, %v53
    %55 = vmatmul.f32.gmra.mxu0 %v34
    %v56 = vpop.f32.mrf.mxu0
    %v57 = vadd.f32 %v27, %v56
    %58 = vdwg.mxu0
    %v59 = vmax.f32 %v54, 0.0
    %v60 = vmax.f32 %v57, 0.0
    %v61 = vld [vmem:[%s3] sm:$0xff]
    %v62 = vld [vmem:[%s3 + $0x8] sm:$0xff]
    %v63 = vld [vmem:[%s3 + $0x10] sm:$0xff]
    %v64 = vld [vmem:[%s3 + $0x18] sm:$0xff]
    %v65 = vld [vmem:[%s3 + $0x20] sm:$0xff]
    %v66 = vld [vmem:[%s3 + $0x28] sm:$0xff]
    %v67 = vld [vmem:[%s3 + $0x30] sm:$0xff]
    %v68 = vld [vmem:[%s3 + $0x38] sm:$0xff]
    %v69 = vld [vmem:[%s4] sm:$0x1]
    %v71 = vperm.slane %v69, 0
    %vm73 = vcmask 523264
    %v75 = vsel %vm73, %v59, 0
    %v78 = vsel %vm73, %v60, 0
    %80 = vmatpush.msra.mxu0 0.0
    %81 = vmatpush.msra.mxu0 0.0
    %82 = vmatpush.msra.mxu0 0.0
    %83 = vmatpush.msra.mxu0 0.0
    %84 = vmatpush.msra.mxu0 0.0
    %85 = vmatpush.msra.mxu0 0.0
    %86 = vmatpush.msra.mxu0 0.0
    %87 = vmatpush.msra.mxu0 0.0
    %88 = vmatpush.msra.mxu0 %v68
    %89 = vmatpush.msra.mxu0 %v67
    %90 = vmatpush.msra.mxu0 %v66
    %91 = vmatpush.msra.mxu0 %v65
    %92 = vmatpush.msra.mxu0 %v64
    %93 = vmatpush.msra.mxu0 %v63
    %94 = vmatpush.msra.mxu0 %v62
    %95 = vmatpush.msra.mxu0 %v61
    %96 = vmatmul.f32.gmra.mxu0 %v75
    %v97 = vpop.f32.mrf.mxu0
    %v98 = vadd.f32 %v71, %v97
    %99 = vmatmul.f32.gmra.mxu0 %v78
    %v100 = vpop.f32.mrf.mxu0
    %v101 = vadd.f32 %v71, %v100
    %102 = vdwg.mxu0
    %v103 = vmul.f32 %v98, 1.442695
    %v104 = vpow.pop %v103
    %v105 = vmul.f32 %v101, 1.442695
    %v106 = vpow.pop %v105
    %v107 = vmul.f32 %v21, %v104
    %v108 = vmul.f32 %v22, %v106
    %111 = vrot.lane.b32.xlu0 %v98, 16
    %v112 = vpop.permute.xlu0 %111
    %113 = vrot.lane.b32.xlu0 %v101, 16
    %v114 = vpop.permute.xlu0 %113
    %v117 = vadd.f32 %v107, %v112
    %v118 = vadd.f32 %v108, %v114
    %119 = vrot.lane.b32.xlu0 %v98, 32
    %v120 = vpop.permute.xlu0 %119
    %121 = vrot.lane.b32.xlu0 %v101, 32
    %v122 = vpop.permute.xlu0 %121
    %v125 = vsel %vm29, %v21, %v117
    %v126 = vsel %vm29, %v22, %v118
    %vm127 = vcmask 261120
    %v128 = vsel %vm127, %v125, 0.0
    %v129 = vsel %vm127, %v126, 0.0
    %vm130 = vcmask 392192
    %v131 = vsel %vm130, %v128, %v120
    %v132 = vsel %vm130, %v129, %v122
    %133 = vst.msk [vmem:[#allocation2] sm:$0xff] %vm73, %v131
    %134 = vst.msk [vmem:[#allocation2 + $0x8] sm:$0xff] %vm73, %v132
    // Predicated region
    $region22: #{tpu_custom_call.1} parent=1 // pred_check
      _
    $region23: #{tpu_custom_call.1} parent=1 // pred_check_branch
      %136 = sbr.rel (0) target = $region25
    $region24: #{tpu_custom_call.1} parent=1 // pred_region
      %138 = vsyncadd [#allocation3], 0
      %s139 = sshll.u32 [#allocation2], 4
      %s140 = int_to_ptr.vmem [resolvable:$true] %s139
      %s141 = sshll.u32 %s5, 4
      %s142 = int_to_ptr.hbm [resolvable:$true] %s141
      %147 = dma.vmem_to_hbm [thread:$0]  %s140, 256, %s142, [#allocation3], 128, 128, 8
    $region25: #{tpu_custom_call.1} parent=1 // pred_fallthru
      _
    // Predicated region
    $region26: #{tpu_custom_call.1} parent=1 // pred_check
      _
    $region27: #{tpu_custom_call.1} parent=1 // pred_check_branch
      %149 = sbr.rel (0) target = $region29
    $region28: #{tpu_custom_call.1} parent=1 // pred_region
      %151 = dma.done [#allocation3], 256
    $region29: #{tpu_custom_call.1} parent=1 // pred_fallthru
      _
    %152 = vsyncpa [#allocation3], 1

</llo_original>
